<compile_context>
chip_gen: v7x
topology: tpu7x:2x2x1
jax: 0.10.0
libtpu: 0.0.40
codegen_flags: <defaults>
</compile_context>

<pallas_src>
import functools

import jax
import jax.numpy as jnp
from jax.experimental import pallas as pl
from jax.experimental.pallas import tpu as pltpu


def _scale_kernel(w_ref, x_ref, o_ref):
    # w_ref: SMEM (1,) 32-bit scalar — the already-selected weight[index]
    # x_ref / o_ref: (tile_r, lanes) VMEM blocks of the flattened input/output
    w = w_ref[0].astype(o_ref.dtype)          # one scalar cast per block
    o_ref[...] = (x_ref[...] * w).astype(o_ref.dtype)


_LANE_CHOICES = (1024, 512, 256, 128)


@functools.lru_cache(maxsize=1)
def _vmem_capacity_bytes() -> int:
    try:
        info = pltpu.get_tpu_info()
        cap = getattr(info, "vmem_capacity_bytes", None)
        if cap:
            return int(cap)
    except Exception:  # pragma: no cover - query unavailable (e.g. interpret)
        pass
    return 128 * 1024 * 1024  # conservative default (v5e/v6e)


def _block_plan(lanes: int, in_itemsize: int, out_itemsize: int):
    """Pick (target_rows, sublane_mult, vmem_limit_bytes) for this generation."""
    cap = _vmem_capacity_bytes()
    # Leave at least half of physical VMEM for compiler scratch / pipeline.
    vmem_limit = int(min(cap // 2, 64 * 1024 * 1024))
    # One array tile; footprint ≈ block × (in + out) × 2 buffers ≤ vmem_limit/2.
    target_block_bytes = max(2 * 1024 * 1024,
                             min(6 * 1024 * 1024, vmem_limit // 8))
    itemsize = max(in_itemsize, out_itemsize)
    target_rows = max(1, target_block_bytes // (lanes * itemsize))
    # Packed-sublane multiple: 8 for 32-bit, 16 for 16-bit, 32 for 8-bit dtypes.
    sublane_mult = max(8, 32 // min(in_itemsize, 4), 32 // min(out_itemsize, 4))
    target_rows -= target_rows % sublane_mult
    target_rows = max(sublane_mult, target_rows)
    return target_rows, vmem_limit


def _run_tiled(w_sel, x2d, out_dtype, tile_r, lanes, vmem_limit, alias_io):
    rows = x2d.shape[0]
    grid = (pl.cdiv(rows, tile_r),)
    extra = {"input_output_aliases": {1: 0}} if alias_io else {}
    return pl.pallas_call(
        _scale_kernel,
        out_shape=jax.ShapeDtypeStruct((rows, lanes), out_dtype),
        grid=grid,
        in_specs=[
            pl.BlockSpec(memory_space=pltpu.MemorySpace.SMEM),   # selected scalar
            pl.BlockSpec((tile_r, lanes), lambda i: (i, 0)),     # x tile
        ],
        out_specs=pl.BlockSpec((tile_r, lanes), lambda i: (i, 0)),
        compiler_params=pltpu.CompilerParams(
            dimension_semantics=("parallel",),   # shards across v7x's 2 TCs
            vmem_limit_bytes=vmem_limit,
        ),
        **extra,
    )(w_sel, x2d)


def weight_selection(weight: jax.Array, x: jax.Array, index,
                     donate_x: bool = False) -> jax.Array:
    """out = weight[index] * x, with the broadcast-multiply done in Pallas."""
    orig_shape = x.shape
    n_elem = x.size
    out_dtype = jnp.result_type(weight.dtype, x.dtype)

    # 1-element gather in the wrapper.  SMEM wants 32-bit scalars: keep f32 for
    # floating outputs (cast to out_dtype once inside the kernel), i32 for ints.
    idx = jnp.asarray(index, dtype=jnp.int32)
    w_sel = jax.lax.dynamic_index_in_dim(weight, idx, axis=0, keepdims=True)
    if jnp.issubdtype(out_dtype, jnp.integer):
        smem_dtype = jnp.int32
    else:
        smem_dtype = jnp.float32
    w_smem = w_sel.astype(smem_dtype)

    in_itemsize = jnp.dtype(x.dtype).itemsize
    out_itemsize = jnp.dtype(out_dtype).itemsize

    if n_elem == 0:
        return jnp.zeros(orig_shape, dtype=out_dtype)

    # Widest lane-dense last dim that divides x.size (zero-copy reshape).
    lanes = None
    for cand in _LANE_CHOICES:
        if n_elem % cand == 0:
            lanes = cand
            break

    alias_io = bool(donate_x) and (x.dtype == out_dtype)

    if lanes is not None:
        rows = n_elem // lanes
        target_rows, vmem_limit = _block_plan(lanes, in_itemsize, out_itemsize)
        tile_r = rows if rows <= target_rows else target_rows
        x2d = jnp.reshape(x, (rows, lanes))
        out2d = _run_tiled(w_smem, x2d, out_dtype, tile_r, lanes,
                           vmem_limit, alias_io)
        return jnp.reshape(out2d, orig_shape)

    # Ragged case (x.size % 128 != 0): run the kernel on the lane-aligned
    # prefix and handle the <128-element tail with a trivial jnp multiply —
    # avoids the full extra HBM pass a jnp.pad of x would cost.
    lanes = 128
    rows = n_elem // lanes
    n_main = rows * lanes
    x_flat = jnp.reshape(x, (-1,))
    tail = x_flat[n_main:]
    tail_out = (w_sel[0] * tail).astype(out_dtype)

    if rows > 0:
        target_rows, vmem_limit = _block_plan(lanes, in_itemsize, out_itemsize)
        tile_r = rows if rows <= target_rows else target_rows
        x2d = jnp.reshape(x_flat[:n_main], (rows, lanes))
        main_out = jnp.reshape(
            _run_tiled(w_smem, x2d, out_dtype, tile_r, lanes,
                       vmem_limit, alias_io),
            (-1,))
        out_flat = jnp.concatenate([main_out, tail_out])
    else:
        out_flat = tail_out
    return jnp.reshape(out_flat, orig_shape)


if __name__ == "__main__":
    key = jax.random.PRNGKey(0)
    kx, kw = jax.random.split(key)

    # Module parameter: weight = ones([weight_len]) in the PyTorch __init__;
    # perturb deterministically so the selection is visible.
    weight_len = 8
    weight = jnp.ones((weight_len,), dtype=jnp.float32) \
        + 0.1 * jax.random.normal(kw, (weight_len,), dtype=jnp.float32)

    # Input consistent with an NCHW feature map.
    x = jax.random.normal(kx, (2, 4, 16, 16), dtype=jnp.float32)
    index = 3

    out = weight_selection(weight, x, index)
    out = jax.block_until_ready(out)

    # Reference check against plain JAX semantics of weight[index] * x.
    ref = weight[index] * x
    assert out.shape == x.shape
    assert out.dtype == ref.dtype
    assert jnp.allclose(out, ref, atol=1e-6, rtol=1e-6)

    # Also exercise the ragged-tail path (x.size % 128 != 0) once.
    x_ragged = jax.random.normal(kx, (3, 5, 7), dtype=jnp.float32)
    out_r = jax.block_until_ready(weight_selection(weight, x_ragged, 5))
    assert jnp.allclose(out_r, weight[5] * x_ragged, atol=1e-6, rtol=1e-6)

    print("KERNEL_OK")
</pallas_src>

<mosaic_0001>
module attributes {stable_mosaic.version = 11 : i64} {
  func.func @_scale_kernel(%arg0: i32, %arg1: memref<1xf32, #tpu.memory_space<smem>>, %arg2: memref<2x1024xf32, #tpu.memory_space<vmem>>, %arg3: memref<2x1024xf32, #tpu.memory_space<vmem>>) attributes {dimension_semantics = [#tpu.dimension_semantics<parallel>], iteration_bounds = array<i64: 1>, scalar_prefetch = 0 : i64, scratch_operands = 0 : i64, tpu.core_type = #tpu.core_type<tc>, window_params = [{transform_indices = @transform_0, window_bounds = array<i64: 1>}, {transform_indices = @transform_1, window_bounds = array<i64: 2, 1024>}, {transform_indices = @transform_2, window_bounds = array<i64: 2, 1024>}]} {
    %c0 = arith.constant 0 : index
    %0 = memref.load %arg1[%c0] : memref<1xf32, #tpu.memory_space<smem>>
    %c0_0 = arith.constant 0 : index
    %c0_1 = arith.constant 0 : index
    %1 = vector.load %arg2[%c0_0, %c0_1] : memref<2x1024xf32, #tpu.memory_space<vmem>>, vector<2x1024xf32>
    %2 = vector.broadcast %0 : f32 to vector<2x1024xf32>
    %3 = arith.mulf %1, %2 : vector<2x1024xf32>
    %c0_2 = arith.constant 0 : index
    %c0_3 = arith.constant 0 : index
    %4 = vector.load %arg3[%c0_2, %c0_3] : memref<2x1024xf32, #tpu.memory_space<vmem>>, vector<2x1024xf32>
    tpu.vector_store %arg3[%c0_2, %c0_3], %3 {strides = array<i32>} : memref<2x1024xf32, #tpu.memory_space<vmem>>, vector<2x1024xf32>,
    return
  }
  func.func @transform_0(%arg0: i32) -> i32 {
    %c0_i32 = arith.constant 0 : i32
    %c0_i32_0 = arith.constant 0 : i32
    return %c0_i32 : i32
  }
  func.func @transform_1(%arg0: i32) -> (i32, i32) {
    %c0_i32 = arith.constant 0 : i32
    %c0_i32_0 = arith.constant 0 : i32
    return %arg0, %c0_i32 : i32, i32
  }
  func.func @transform_2(%arg0: i32) -> (i32, i32) {
    %c0_i32 = arith.constant 0 : i32
    %c0_i32_0 = arith.constant 0 : i32
    return %arg0, %c0_i32 : i32, i32
  }
}

</mosaic_0001>

<llo_original>
// kernel: tpu_custom_call.1
$region0: #{tpu_custom_call.1}
  #allocation0 [shape = 'u32[]', space=smem, size = 0x4, offset = 0x4, fixed_abs, tag = 'smem constant byte address 0x4 - core index']
  #allocation1 [shape = 'u32[144,128]{1,0:T(1,128)}', space=vmem, size = 0x12000, scoped, tag = 'internal scratch']
  #allocation2 [shape = 'f32[1]{0:T(128)S(6)}', space=smem, size = 0x200, scoped, tag = 'scoped memory for tpu_custom_call.1']
  %s0 = inlined_call_operand.<no memory space> [shape: f32[1], index: 0, kind: input, shape index: {}]
  %s1 = inlined_call_operand.hbm [shape: f32[2,1024], index: 1, kind: input, shape index: {}]
  %s2 = inlined_call_operand.hbm [shape: f32[2,1024], index: 2, kind: output, shape index: {}]
  %s3 = sld [smem:[#allocation0]]
  $region22: #{tpu_custom_call.1} parent=0
    _
  %s5 = ssub.s32 1, %s3
  %s6 = scalar_select 0, %s5, %s3
  %7 = sst [smem:[#allocation2]] %s0
  $region1: #{tpu_custom_call.1} parent=0
    #allocation3 [shape = 'u8[8192]{0}', space=vmem, size = 0x2000, scoped, tag = 'input window, operand 1, single buffered']
    #allocation4 [shape = 's32[1]{0}', space=sflag, size = 0x4, scoped, tag = 'scoped memory for tpu_custom_call.1']
    #allocation5 [shape = 's32[1]{0}', space=sflag, size = 0x4, scoped, tag = 'scoped memory for tpu_custom_call.1']
    #allocation6 [shape = 'u8[8192]{0}', space=vmem, size = 0x2000, scoped, tag = 'output window, operand 0, single buffered']
    %8 = vsyncpa [#allocation4], 0
    %9 = vsyncpa [#allocation5], 0
    // Predicated region
    $region2: #{tpu_custom_call.1} parent=1 // pred_check
      _
    $region3: #{tpu_custom_call.1} parent=1 // pred_check_branch
      %11 = sbr.rel (0) target = $region5
    $region4: #{tpu_custom_call.1} parent=1 // pred_region
      _
    $region5: #{tpu_custom_call.1} parent=1 // pred_fallthru
      _
    // Predicated region
    $region6: #{tpu_custom_call.1} parent=1 // pred_check
      _
    $region7: #{tpu_custom_call.1} parent=1 // pred_check_branch
      %13 = sbr.rel (0) target = $region9
    $region8: #{tpu_custom_call.1} parent=1 // pred_region
      %s15 = ssub.s32 256, 256
      %16 = vsyncadd [#allocation4], %s15
      %s18 = sshll.u32 [#allocation3], 4
      %s19 = int_to_ptr.vmem [resolvable:$true] %s18
      %21 = dma.hbm_to_vmem [thread:$0]  %s1, 256, %s19, [#allocation4]
    $region9: #{tpu_custom_call.1} parent=1 // pred_fallthru
      _
    // Predicated region
    $region10: #{tpu_custom_call.1} parent=1 // pred_check
      _
    $region11: #{tpu_custom_call.1} parent=1 // pred_check_branch
      %23 = sbr.rel (0) target = $region13
    $region12: #{tpu_custom_call.1} parent=1 // pred_region
      %24 = dma.done [#allocation4], 256
    $region13: #{tpu_custom_call.1} parent=1 // pred_fallthru
      _
    %s25 = sld [smem:[#allocation2]]
    %v26 = vld [vmem:[#allocation3] sm:$0xff]
    %v27 = vld [vmem:[#allocation3 + $0x8] sm:$0xff]
    %v28 = vstv %s25
    %v29 = vmul.f32 %v26, %v28
    %v30 = vmul.f32 %v27, %v28
    %31 = vst [vmem:[#allocation6] sm:$0xff] %v29
    %32 = vst [vmem:[#allocation6 + $0x8] sm:$0xff] %v30
    // Predicated region
    $region14: #{tpu_custom_call.1} parent=1 // pred_check
      _
    $region15: #{tpu_custom_call.1} parent=1 // pred_check_branch
      %34 = sbr.rel (0) target = $region17
    $region16: #{tpu_custom_call.1} parent=1 // pred_region
      %s36 = ssub.s32 256, 256
      %37 = vsyncadd [#allocation5], %s36
      %s39 = sshll.u32 [#allocation6], 4
      %s40 = int_to_ptr.vmem [resolvable:$true] %s39
      %42 = dma.vmem_to_hbm [thread:$0]  %s40, 256, %s2, [#allocation5]
    $region17: #{tpu_custom_call.1} parent=1 // pred_fallthru
      _
    // Predicated region
    $region18: #{tpu_custom_call.1} parent=1 // pred_check
      _
    $region19: #{tpu_custom_call.1} parent=1 // pred_check_branch
      %44 = sbr.rel (0) target = $region21
    $region20: #{tpu_custom_call.1} parent=1 // pred_region
      %45 = dma.done [#allocation5], 256
    $region21: #{tpu_custom_call.1} parent=1 // pred_fallthru
      _
    %46 = vsyncpa [#allocation4], 1
    %47 = vsyncpa [#allocation5], 1

</llo_original>
